<compile_context>
chip_gen: v5e
topology: v5e:2x2
jax: 0.10.0
libtpu: 0.0.40
codegen_flags: <defaults>
</compile_context>

<pallas_src>
import functools

import jax
import jax.numpy as jnp
from jax.experimental import pallas as pl
from jax.experimental.pallas import tpu as pltpu


def _round_up(x, m):
    return (x + m - 1) // m * m


def _cdiv(a, b):
    return -(-a // b)


def _vmem_limit_bytes():
    """Generation-aware VMEM limit: ~3/4 of physical capacity
    (~96 MiB on v5e/v6e's 128 MiB, ~48 MiB on v7x's 64 MiB)."""
    try:
        return int(pltpu.get_tpu_info().vmem_capacity_bytes) * 3 // 4
    except Exception:
        return 32 * 1024 * 1024  # conservative fallback; known-good everywhere


# ---------------------------------------------------------------------------
# Fused kernel: all layers in one body, the activation never leaves VMEM.
# Refs: (x_ref, w0_ref, b0_ref, w1_ref, b1_ref, ..., o_ref)
# ---------------------------------------------------------------------------
def _fused_sparse_net_kernel(*refs, n_layers, apply_act, n_tile):
    x_ref = refs[0]
    o_ref = refs[-1]

    h = x_ref[...]                                      # (tb, f0_pad) bf16
    for i in range(n_layers):                           # unrolled at trace time
        w_ref = refs[1 + 2 * i]                         # (fi_pad, fi1_pad) bf16
        b_ref = refs[2 + 2 * i]                         # (1,  fi1_pad) f32
        out_w = w_ref.shape[1]
        is_last = i == n_layers - 1

        # N-tile the layer: only one (tb, n_tile) f32 accumulator is live at a
        # time, so wide hidden/output layers don't spill the vreg file.
        chunks = []
        for n0 in range(0, out_w, n_tile):
            t = min(n_tile, out_w - n0)
            acc = jnp.dot(h, w_ref[:, n0:n0 + t],
                          preferred_element_type=jnp.float32)
            acc = acc + b_ref[:, n0:n0 + t]
            if is_last:
                # Last layer: store the slice directly (bf16 out path supported).
                o_ref[:, n0:n0 + t] = acc.astype(o_ref.dtype)
            else:
                if apply_act:
                    # ReLU only; the per-layer sparsity mask is already folded
                    # into w/b (valid because m in {0,1}).
                    acc = jnp.maximum(acc, 0.0)
                chunks.append(acc.astype(jnp.bfloat16))  # bf16 feed to next MXU pass
        if not is_last:
            h = chunks[0] if len(chunks) == 1 else jnp.concatenate(chunks, axis=-1)


def sparse_net_forward(x_pad, weights_pad, biases_pad, *, apply_act, batch_block,
                       out_dtype, vmem_limit, n_tile=256):
    """Run the fused network. x_pad: (B_pad, f0_pad) bf16; weights (in,out) bf16."""
    b_pad, f0_pad = x_pad.shape
    n_layers = len(weights_pad)
    f_last_pad = weights_pad[-1].shape[1]
    grid = (b_pad // batch_block,)

    in_specs = [pl.BlockSpec((batch_block, f0_pad), lambda i: (i, 0))]
    operands = [x_pad]
    for w, b in zip(weights_pad, biases_pad):
        # Constant index_map + Buffered(1): each weight/bias is DMA'd once and
        # stays single-buffered in VMEM across all batch blocks (default
        # double-buffering would just duplicate constant data).
        in_specs.append(pl.BlockSpec(w.shape, lambda i: (0, 0),
                                     pipeline_mode=pl.Buffered(1)))
        in_specs.append(pl.BlockSpec(b.shape, lambda i: (0, 0),
                                     pipeline_mode=pl.Buffered(1)))
        operands += [w, b]

    kernel = functools.partial(
        _fused_sparse_net_kernel, n_layers=n_layers, apply_act=apply_act,
        n_tile=n_tile)

    out_itemsize = jnp.dtype(out_dtype).itemsize
    flops = 2 * b_pad * sum(int(w.shape[0]) * int(w.shape[1]) for w in weights_pad)
    bytes_accessed = (
        int(x_pad.size) * x_pad.dtype.itemsize
        + sum(int(w.size) * w.dtype.itemsize for w in weights_pad)
        + sum(int(b.size) * b.dtype.itemsize for b in biases_pad)
        + b_pad * f_last_pad * out_itemsize)

    return pl.pallas_call(
        kernel,
        out_shape=jax.ShapeDtypeStruct((b_pad, f_last_pad), out_dtype),
        grid=grid,
        in_specs=in_specs,
        out_specs=pl.BlockSpec((batch_block, f_last_pad), lambda i: (i, 0)),
        compiler_params=pltpu.CompilerParams(
            dimension_semantics=("parallel",),   # megacore: shard batch blocks
            vmem_limit_bytes=vmem_limit,
        ),
        cost_estimate=pl.CostEstimate(
            flops=flops, transcendentals=0, bytes_accessed=bytes_accessed),
    )(*operands)


# ---------------------------------------------------------------------------
# Module wrapper: parameter construction, mask folding, padding, bf16 cast.
# ---------------------------------------------------------------------------
class SparseNetPallas:
    """JAX/Pallas re-implementation of SparseNet.forward (activation: relu / None)."""

    def __init__(self, layer_sizes, sparsity=0.4, activation=None, key=None,
                 out_dtype=jnp.float32):
        assert isinstance(layer_sizes, (tuple, list)) and len(layer_sizes) >= 2
        if activation not in (None, "relu"):
            # TODO(synk): relu6/sigmoid/elu/leaky_relu/logsigmoid need the mask kept
            # as a separate kernel input (folding into W/b is only valid for relu).
            raise NotImplementedError("only activation in (None, 'relu') supported")

        self.layer_sizes = tuple(layer_sizes)
        self.n_layers = len(layer_sizes) - 1
        self.activation = activation
        self.out_features = layer_sizes[-1]
        self.out_dtype = jnp.dtype(out_dtype)     # bf16 opt-in halves HBM writeback
        self.vmem_limit = _vmem_limit_bytes()
        if key is None:
            key = jax.random.PRNGKey(0)

        # Raw PyTorch-style params (kept in f32 for reference checking).
        self.weights_f32 = []   # (out, in)
        self.biases_f32 = []    # (out,)
        self.masks_f32 = []     # (out,)  keep-prob == sparsity (matches PyTorch)
        for i in range(self.n_layers):
            fan_in, fan_out = layer_sizes[i], layer_sizes[i + 1]
            key, kw, kb, km = jax.random.split(key, 4)
            bound = 1.0 / jnp.sqrt(fan_in)        # nn.Linear default init range
            w = jax.random.uniform(kw, (fan_out, fan_in), jnp.float32, -bound, bound)
            b = jax.random.uniform(kb, (fan_out,), jnp.float32, -bound, bound)
            m = (jax.random.uniform(km, (fan_out,), jnp.float32) > (1.0 - sparsity))
            self.weights_f32.append(w)
            self.biases_f32.append(b)
            self.masks_f32.append(m.astype(jnp.float32))

        # Kernel-ready params: fold mask (only where PyTorch applies it:
        # activation set AND hidden layer), transpose once, zero-pad to 128
        # lanes, bf16 weights (f32 accumulation happens on the MXU).
        self.padded_sizes = [_round_up(s, 128) for s in layer_sizes]
        self.w_pad = []   # (in_pad, out_pad) bf16
        self.b_pad = []   # (1, out_pad) f32
        for i in range(self.n_layers):
            w = self.weights_f32[i]
            b = self.biases_f32[i]
            if self.activation is not None and i < self.n_layers - 1:
                m = self.masks_f32[i]
                w = w * m[:, None]                 # fold mask into weight rows
                b = b * m                          # and into the bias
            w_t = w.T                              # (in, out) — transpose once
            in_p = self.padded_sizes[i]
            out_p = self.padded_sizes[i + 1]
            w_t = jnp.pad(w_t, ((0, in_p - w_t.shape[0]), (0, out_p - w_t.shape[1])))
            b_p = jnp.pad(b, (0, out_p - b.shape[0]))[None, :]
            self.w_pad.append(w_t.astype(jnp.bfloat16))
            self.b_pad.append(b_p.astype(jnp.float32))

        # Resident (single-buffered) parameter bytes for the VMEM budget.
        self._param_bytes = (sum(int(w.size) * 2 for w in self.w_pad)
                             + sum(int(b.size) * 4 for b in self.b_pad))

    # -- batch-block selection: 16-aligned, VMEM-budgeted, >=2 grid steps ----
    def _pick_batch_block(self, batch):
        b16 = _round_up(batch, 16)               # bf16 vreg tile is (16, 128)

        out_itemsize = self.out_dtype.itemsize
        out_max = max(self.padded_sizes[1:])
        hidden_max = max(self.padded_sizes[1:-1]) if len(self.padded_sizes) > 2 else 0
        per_row = (2 * 2 * self.padded_sizes[0]          # x: bf16, double-buffered
                   + 2 * out_itemsize * self.padded_sizes[-1]  # out: double-buffered
                   + 4 * min(256, out_max)                # live f32 N-tile accumulator
                   + 2 * hidden_max)                      # bf16 inter-layer activation
        avail = self.vmem_limit - self._param_bytes - (2 << 20)   # 2 MiB slack
        if avail < 16 * per_row:
            # TODO(synk): weights exceed the all-resident VMEM budget; would need a
            # weight-streaming fallback (pltpu.emit_pipeline over layer/N slices).
            raise NotImplementedError(
                "network too large for resident-weight fused kernel")
        cap = max(16, min(1024, (avail // per_row) // 16 * 16))

        # >=2 grid steps when the batch allows, so v7x's two TensorCores both get
        # work (negligible cost on v5e/v6e); block chosen to divide the padded
        # batch, so tail waste is bounded instead of up to ~2x.
        min_blocks = 2 if b16 >= 32 else 1
        n_blocks = max(min_blocks, _cdiv(b16, cap))
        batch_block = _round_up(_cdiv(b16, n_blocks), 16)
        return batch_block, n_blocks * batch_block

    def __call__(self, x):
        batch, f0 = x.shape
        assert f0 == self.layer_sizes[0]
        batch_block, b_pad = self._pick_batch_block(batch)
        x_pad = jnp.pad(
            x, ((0, b_pad - batch), (0, self.padded_sizes[0] - f0))
        ).astype(jnp.bfloat16)
        y_pad = sparse_net_forward(
            x_pad, self.w_pad, self.b_pad,
            apply_act=self.activation is not None,
            batch_block=batch_block,
            out_dtype=self.out_dtype,
            vmem_limit=self.vmem_limit)
        return y_pad[:batch, :self.out_features]


# ---------------------------------------------------------------------------
# Reference implementations for checking.
# ---------------------------------------------------------------------------
def _reference_quantized(net, x):
    """Mirror the kernel's numerics (mask folded, bf16 W & activations, f32 acc)."""
    h = x.astype(jnp.bfloat16).astype(jnp.float32)
    for i in range(net.n_layers):
        w = net.weights_f32[i]
        b = net.biases_f32[i]
        if net.activation is not None and i < net.n_layers - 1:
            m = net.masks_f32[i]
            w = w * m[:, None]
            b = b * m
        h = h @ w.T.astype(jnp.bfloat16).astype(jnp.float32) + b
        if i < net.n_layers - 1:
            if net.activation is not None:
                h = jnp.maximum(h, 0.0)
            h = h.astype(jnp.bfloat16).astype(jnp.float32)
    return h


def _reference_torch_semantics(net, x):
    """Pure-f32 PyTorch semantics: linear -> activation -> mask on hidden layers."""
    h = x
    for i in range(net.n_layers):
        h = h @ net.weights_f32[i].T + net.biases_f32[i]
        if net.activation is not None and i < net.n_layers - 1:
            h = jnp.maximum(h, 0.0) * net.masks_f32[i]
    return h


if __name__ == "__main__":
    key = jax.random.PRNGKey(0)
    layer_sizes = (32, 64, 16)          # input, hidden, output

    net = SparseNetPallas(layer_sizes, sparsity=0.4, activation="relu", key=key)

    # batch=8  -> single 16-row block (grid=(1,))
    # batch=40 -> two 32-row blocks (grid=(2,)): exercises megacore split + padding
    for batch in (8, 40):
        key, kx = jax.random.split(key)
        x = jax.random.normal(kx, (batch, layer_sizes[0]), jnp.float32)

        y = jax.block_until_ready(net(x))
        assert y.shape == (batch, layer_sizes[-1])

        # Tight check against the kernel's exact quantization path.
        ref_q = _reference_quantized(net, x)
        assert jnp.allclose(y.astype(jnp.float32), ref_q, atol=2e-3, rtol=2e-3)

        # Loose semantic check against the original PyTorch forward (pure f32).
        ref = _reference_torch_semantics(net, x)
        assert jnp.allclose(y.astype(jnp.float32), ref, atol=1e-1, rtol=1e-1)

    print("KERNEL_OK")
</pallas_src>

<mosaic_0001>
module attributes {stable_mosaic.version = 11 : i64} {
  func.func @_fused_sparse_net_kernel(%arg0: i32, %arg1: memref<16x128xbf16, #tpu.memory_space<vmem>>, %arg2: memref<128x128xbf16, #tpu.memory_space<vmem>>, %arg3: memref<1x128xf32, #tpu.memory_space<vmem>>, %arg4: memref<128x128xbf16, #tpu.memory_space<vmem>>, %arg5: memref<1x128xf32, #tpu.memory_space<vmem>>, %arg6: memref<16x128xf32, #tpu.memory_space<vmem>>) attributes {dimension_semantics = [#tpu.dimension_semantics<parallel>], iteration_bounds = array<i64: 1>, scalar_prefetch = 0 : i64, scratch_operands = 0 : i64, tpu.core_type = #tpu.core_type<tc>, window_params = [{transform_indices = @transform_0, window_bounds = array<i64: 16, 128>}, {pipeline_mode = #tpu.pipeline_mode<synchronous>, transform_indices = @transform_1, window_bounds = array<i64: 128, 128>}, {pipeline_mode = #tpu.pipeline_mode<synchronous>, transform_indices = @transform_2, window_bounds = array<i64: 1, 128>}, {pipeline_mode = #tpu.pipeline_mode<synchronous>, transform_indices = @transform_3, window_bounds = array<i64: 128, 128>}, {pipeline_mode = #tpu.pipeline_mode<synchronous>, transform_indices = @transform_4, window_bounds = array<i64: 1, 128>}, {transform_indices = @transform_5, window_bounds = array<i64: 16, 128>}]} {
    %c0 = arith.constant 0 : index
    %c0_0 = arith.constant 0 : index
    %0 = vector.load %arg1[%c0, %c0_0] : memref<16x128xbf16, #tpu.memory_space<vmem>>, vector<16x128xbf16>
    %c0_1 = arith.constant 0 : index
    %c0_2 = arith.constant 0 : index
    %1 = vector.load %arg2[%c0_1, %c0_2] : memref<128x128xbf16, #tpu.memory_space<vmem>>, vector<128x128xbf16>
    %cst = arith.constant dense<0.000000e+00> : vector<16x128xf32>
    %2 = tpu.matmul %0, %1, %cst {dimension_numbers = #tpu.dot_dimension_numbers<[1], [0], [0], [1], [0, 0, 1, 1], [], []>} : vector<16x128xbf16>, vector<128x128xbf16>, vector<16x128xf32> -> vector<16x128xf32>
    %c0_3 = arith.constant 0 : index
    %c0_4 = arith.constant 0 : index
    %3 = vector.load %arg3[%c0_3, %c0_4] : memref<1x128xf32, #tpu.memory_space<vmem>>, vector<1x128xf32>
    %4 = vector.broadcast %3 : vector<1x128xf32> to vector<16x128xf32>
    %5 = arith.addf %2, %4 : vector<16x128xf32>
    %cst_5 = arith.constant 0.000000e+00 : f32
    %6 = vector.broadcast %cst_5 : f32 to vector<16x128xf32>
    %7 = arith.maximumf %5, %6 : vector<16x128xf32>
    %8 = arith.truncf %7 : vector<16x128xf32> to vector<16x128xbf16>
    %c0_6 = arith.constant 0 : index
    %c0_7 = arith.constant 0 : index
    %9 = vector.load %arg4[%c0_6, %c0_7] : memref<128x128xbf16, #tpu.memory_space<vmem>>, vector<128x128xbf16>
    %cst_8 = arith.constant dense<0.000000e+00> : vector<16x128xf32>
    %10 = tpu.matmul %8, %9, %cst_8 {dimension_numbers = #tpu.dot_dimension_numbers<[1], [0], [0], [1], [0, 0, 1, 1], [], []>} : vector<16x128xbf16>, vector<128x128xbf16>, vector<16x128xf32> -> vector<16x128xf32>
    %c0_9 = arith.constant 0 : index
    %c0_10 = arith.constant 0 : index
    %11 = vector.load %arg5[%c0_9, %c0_10] : memref<1x128xf32, #tpu.memory_space<vmem>>, vector<1x128xf32>
    %12 = vector.broadcast %11 : vector<1x128xf32> to vector<16x128xf32>
    %13 = arith.addf %10, %12 : vector<16x128xf32>
    %c0_11 = arith.constant 0 : index
    %c0_12 = arith.constant 0 : index
    %14 = vector.load %arg6[%c0_11, %c0_12] : memref<16x128xf32, #tpu.memory_space<vmem>>, vector<16x128xf32>
    tpu.vector_store %arg6[%c0_11, %c0_12], %13 {strides = array<i32>} : memref<16x128xf32, #tpu.memory_space<vmem>>, vector<16x128xf32>,
    return
  }
  func.func @transform_0(%arg0: i32) -> (i32, i32) {
    %c0_i32 = arith.constant 0 : i32
    %c0_i32_0 = arith.constant 0 : i32
    return %arg0, %c0_i32 : i32, i32
  }
  func.func @transform_1(%arg0: i32) -> (i32, i32) {
    %c0_i32 = arith.constant 0 : i32
    %c0_i32_0 = arith.constant 0 : i32
    %c0_i32_1 = arith.constant 0 : i32
    return %c0_i32, %c0_i32_0 : i32, i32
  }
  func.func @transform_2(%arg0: i32) -> (i32, i32) {
    %c0_i32 = arith.constant 0 : i32
    %c0_i32_0 = arith.constant 0 : i32
    %c0_i32_1 = arith.constant 0 : i32
    return %c0_i32, %c0_i32_0 : i32, i32
  }
  func.func @transform_3(%arg0: i32) -> (i32, i32) {
    %c0_i32 = arith.constant 0 : i32
    %c0_i32_0 = arith.constant 0 : i32
    %c0_i32_1 = arith.constant 0 : i32
    return %c0_i32, %c0_i32_0 : i32, i32
  }
  func.func @transform_4(%arg0: i32) -> (i32, i32) {
    %c0_i32 = arith.constant 0 : i32
    %c0_i32_0 = arith.constant 0 : i32
    %c0_i32_1 = arith.constant 0 : i32
    return %c0_i32, %c0_i32_0 : i32, i32
  }
  func.func @transform_5(%arg0: i32) -> (i32, i32) {
    %c0_i32 = arith.constant 0 : i32
    %c0_i32_0 = arith.constant 0 : i32
    return %arg0, %c0_i32 : i32, i32
  }
}

</mosaic_0001>

<llo_original>
// kernel: tpu_custom_call.1
$region0: #{tpu_custom_call.1}
  #allocation0 [shape = 'u32[]', space=smem, size = 0x4, offset = 0x4, fixed_abs, tag = 'smem constant byte address 0x4 - core index']
  #allocation1 [shape = 'u32[72,128]{1,0:T(1,128)}', space=vmem, size = 0x9000, scoped, tag = 'internal scratch']
  %s0 = inlined_call_operand.hbm [shape: bf16[16,128], index: 0, kind: input, shape index: {}]
  %s1 = inlined_call_operand.hbm [shape: bf16[128,128], index: 1, kind: input, shape index: {}]
  %s2 = inlined_call_operand.vmem [shape: f32[1,128], index: 2, kind: input, shape index: {}]
  %s3 = inlined_call_operand.hbm [shape: bf16[128,128], index: 3, kind: input, shape index: {}]
  %s4 = inlined_call_operand.vmem [shape: f32[1,128], index: 4, kind: input, shape index: {}]
  %s5 = inlined_call_operand.hbm [shape: f32[16,128], index: 5, kind: output, shape index: {}]
  %s6 = sld [smem:[#allocation0]]
  $region42: #{tpu_custom_call.1} parent=0
    _
  %s8 = ssub.s32 1, %s6
  %s9 = scalar_select 0, %s8, %s6
  $region1: #{tpu_custom_call.1} parent=0
    #allocation2 [shape = 'u8[4096]{0}', space=vmem, size = 0x1000, scoped, tag = 'input window, operand 0, single buffered']
    #allocation3 [shape = 's32[1]{0}', space=sflag, size = 0x4, scoped, tag = 'scoped memory for tpu_custom_call.1']
    #allocation4 [shape = 's32[1]{0}', space=sflag, size = 0x4, scoped, tag = 'scoped memory for tpu_custom_call.1']
    #allocation5 [shape = 'u8[32768]{0}', space=vmem, size = 0x8000, scoped, tag = 'input window, operand 1, single buffered']
    #allocation6 [shape = 's32[1]{0}', space=sflag, size = 0x4, scoped, tag = 'scoped memory for tpu_custom_call.1']
    #allocation7 [shape = 'u8[32768]{0}', space=vmem, size = 0x8000, scoped, tag = 'input window, operand 3, single buffered']
    #allocation8 [shape = 'u8[8192]{0}', space=vmem, size = 0x2000, scoped, tag = 'output window, operand 0, single buffered']
    %10 = vsyncpa [#allocation3], 0
    %11 = vsyncpa [#allocation6], 0
    %12 = vsyncpa [#allocation4], 0
    // Predicated region
    $region2: #{tpu_custom_call.1} parent=1 // pred_check
      _
    $region3: #{tpu_custom_call.1} parent=1 // pred_check_branch
      %14 = sbr.rel (0) target = $region5
    $region4: #{tpu_custom_call.1} parent=1 // pred_region
      %16 = vsyncadd [#allocation3], 0
      %s17 = sshll.u32 %s0, 4
      %s18 = int_to_ptr.hbm [resolvable:$true] %s17
      %s19 = sshll.u32 [#allocation2], 4
      %s20 = int_to_ptr.vmem [resolvable:$true] %s19
      %25 = dma.hbm_to_vmem [thread:$0]  %s18, 128, %s20, [#allocation3], 64, 64, 4
    $region5: #{tpu_custom_call.1} parent=1 // pred_fallthru
      _
    // Predicated region
    $region6: #{tpu_custom_call.1} parent=1 // pred_check
      _
    $region7: #{tpu_custom_call.1} parent=1 // pred_check_branch
      %27 = sbr.rel (0) target = $region9
    $region8: #{tpu_custom_call.1} parent=1 // pred_region
      %29 = vsyncadd [#allocation6], 0
      %s30 = sshll.u32 %s1, 4
      %s31 = int_to_ptr.hbm [resolvable:$true] %s30
      %s32 = sshll.u32 [#allocation5], 4
      %s33 = int_to_ptr.vmem [resolvable:$true] %s32
      %38 = dma.hbm_to_vmem [thread:$0]  %s31, 1024, %s33, [#allocation6], 64, 64, 4
    $region9: #{tpu_custom_call.1} parent=1 // pred_fallthru
      _
    // Predicated region
    $region10: #{tpu_custom_call.1} parent=1 // pred_check
      _
    $region11: #{tpu_custom_call.1} parent=1 // pred_check_branch
      %40 = sbr.rel (0) target = $region13
    $region12: #{tpu_custom_call.1} parent=1 // pred_region
      _
    $region13: #{tpu_custom_call.1} parent=1 // pred_fallthru
      _
    // Predicated region
    $region14: #{tpu_custom_call.1} parent=1 // pred_check
      _
    $region15: #{tpu_custom_call.1} parent=1 // pred_check_branch
      %42 = sbr.rel (0) target = $region17
    $region16: #{tpu_custom_call.1} parent=1 // pred_region
      %44 = vsyncadd [#allocation6], 0
      %s45 = sshll.u32 %s3, 4
      %s46 = int_to_ptr.hbm [resolvable:$true] %s45
      %s47 = sshll.u32 [#allocation7], 4
      %s48 = int_to_ptr.vmem [resolvable:$true] %s47
      %53 = dma.hbm_to_vmem [thread:$0]  %s46, 1024, %s48, [#allocation6], 64, 64, 4
    $region17: #{tpu_custom_call.1} parent=1 // pred_fallthru
      _
    // Predicated region
    $region18: #{tpu_custom_call.1} parent=1 // pred_check
      _
    $region19: #{tpu_custom_call.1} parent=1 // pred_check_branch
      %55 = sbr.rel (0) target = $region21
    $region20: #{tpu_custom_call.1} parent=1 // pred_region
      _
    $region21: #{tpu_custom_call.1} parent=1 // pred_fallthru
      _
    // Predicated region
    $region22: #{tpu_custom_call.1} parent=1 // pred_check
      _
    $region23: #{tpu_custom_call.1} parent=1 // pred_check_branch
      %57 = sbr.rel (0) target = $region25
    $region24: #{tpu_custom_call.1} parent=1 // pred_region
      %59 = dma.done [#allocation3], 128
    $region25: #{tpu_custom_call.1} parent=1 // pred_fallthru
      _
    // Predicated region
    $region26: #{tpu_custom_call.1} parent=1 // pred_check
      _
    $region27: #{tpu_custom_call.1} parent=1 // pred_check_branch
      %61 = sbr.rel (0) target = $region29
    $region28: #{tpu_custom_call.1} parent=1 // pred_region
      %63 = dma.done [#allocation6], 1024
    $region29: #{tpu_custom_call.1} parent=1 // pred_fallthru
      _
    // Predicated region
    $region30: #{tpu_custom_call.1} parent=1 // pred_check
      _
    $region31: #{tpu_custom_call.1} parent=1 // pred_check_branch
      %65 = sbr.rel (0) target = $region33
    $region32: #{tpu_custom_call.1} parent=1 // pred_region
      %67 = dma.done [#allocation6], 1024
    $region33: #{tpu_custom_call.1} parent=1 // pred_fallthru
      _
    %v68 = vld [vmem:[#allocation2] sm:$0xf]
    %v69 = vld [vmem:[#allocation2 + $0x4] sm:$0xf]
    %v70 = vld [vmem:[#allocation5] sm:$0xf]
    %v71 = vld [vmem:[#allocation5 + $0x4] sm:$0xf]
    %v72 = vld [vmem:[#allocation5 + $0x8] sm:$0xf]
    %v73 = vld [vmem:[#allocation5 + $0xc] sm:$0xf]
    %v74 = vld [vmem:[#allocation5 + $0x10] sm:$0xf]
    %v75 = vld [vmem:[#allocation5 + $0x14] sm:$0xf]
    %v76 = vld [vmem:[#allocation5 + $0x18] sm:$0xf]
    %v77 = vld [vmem:[#allocation5 + $0x1c] sm:$0xf]
    %v78 = vld [vmem:[#allocation5 + $0x20] sm:$0xf]
    %v79 = vld [vmem:[#allocation5 + $0x24] sm:$0xf]
    %v80 = vld [vmem:[#allocation5 + $0x28] sm:$0xf]
    %v81 = vld [vmem:[#allocation5 + $0x2c] sm:$0xf]
    %v82 = vld [vmem:[#allocation5 + $0x30] sm:$0xf]
    %v83 = vld [vmem:[#allocation5 + $0x34] sm:$0xf]
    %v84 = vld [vmem:[#allocation5 + $0x38] sm:$0xf]
    %v85 = vld [vmem:[#allocation5 + $0x3c] sm:$0xf]
    %v86 = vld [vmem:[%s2] sm:$0x1]
    %v88 = vperm.slane %v86, 0
    %v92 = vunpack.c.l.b16 %v68
    %v93 = vunpack.c.l.b16 %v69
    %v94 = vpack.c.b16 %v93, %v92
    %v112 = vunpack.c.l.b16 %v70
    %v113 = vunpack.c.l.b16 %v71
    %v114 = vunpack.c.l.b16 %v72
    %v115 = vunpack.c.l.b16 %v73
    %v116 = vunpack.c.l.b16 %v74
    %v117 = vunpack.c.l.b16 %v75
    %v118 = vunpack.c.l.b16 %v76
    %v119 = vunpack.c.l.b16 %v77
    %v120 = vunpack.c.l.b16 %v78
    %v121 = vunpack.c.l.b16 %v79
    %v122 = vunpack.c.l.b16 %v80
    %v123 = vunpack.c.l.b16 %v81
    %v124 = vunpack.c.l.b16 %v82
    %v125 = vunpack.c.l.b16 %v83
    %v126 = vunpack.c.l.b16 %v84
    %v127 = vunpack.c.l.b16 %v85
    %v128 = vpack.c.b16 %v113, %v112
    %v129 = vpack.c.b16 %v115, %v114
    %v130 = vpack.c.b16 %v117, %v116
    %v131 = vpack.c.b16 %v119, %v118
    %v132 = vpack.c.b16 %v121, %v120
    %v133 = vpack.c.b16 %v123, %v122
    %v134 = vpack.c.b16 %v125, %v124
    %v135 = vpack.c.b16 %v127, %v126
    %144 = vmatpush.bf16.msra.mxu0 %v135
    %145 = vmatpush.bf16.msra.mxu0 %v134
    %146 = vmatpush.bf16.msra.mxu0 %v133
    %147 = vmatpush.bf16.msra.mxu0 %v132
    %148 = vmatpush.bf16.msra.mxu0 %v131
    %149 = vmatpush.bf16.msra.mxu0 %v130
    %150 = vmatpush.bf16.msra.mxu0 %v129
    %151 = vmatpush.bf16.msra.mxu0 %v128
    %152 = vmatmul.bf16.gmra.mxu0 %v94
    %v153 = vpop.f32.mrf.mxu0
    %v154 = vadd.f32 %v88, %v153
    %v155 = vpop.f32.mrf.mxu0
    %v156 = vadd.f32 %v88, %v155
    %157 = vdwg.mxu0
    %v158 = vmax.f32 %v154, 0.0
    %v159 = vmax.f32 %v156, 0.0
    %v160 = vpack.c.bf16 %v159, %v158
    %v161 = vld [vmem:[#allocation7] sm:$0xf]
    %v162 = vld [vmem:[#allocation7 + $0x4] sm:$0xf]
    %v163 = vld [vmem:[#allocation7 + $0x8] sm:$0xf]
    %v164 = vld [vmem:[#allocation7 + $0xc] sm:$0xf]
    %v165 = vld [vmem:[#allocation7 + $0x10] sm:$0xf]
    %v166 = vld [vmem:[#allocation7 + $0x14] sm:$0xf]
    %v167 = vld [vmem:[#allocation7 + $0x18] sm:$0xf]
    %v168 = vld [vmem:[#allocation7 + $0x1c] sm:$0xf]
    %v169 = vld [vmem:[#allocation7 + $0x20] sm:$0xf]
    %v170 = vld [vmem:[#allocation7 + $0x24] sm:$0xf]
    %v171 = vld [vmem:[#allocation7 + $0x28] sm:$0xf]
    %v172 = vld [vmem:[#allocation7 + $0x2c] sm:$0xf]
    %v173 = vld [vmem:[#allocation7 + $0x30] sm:$0xf]
    %v174 = vld [vmem:[#allocation7 + $0x34] sm:$0xf]
    %v175 = vld [vmem:[#allocation7 + $0x38] sm:$0xf]
    %v176 = vld [vmem:[#allocation7 + $0x3c] sm:$0xf]
    %v177 = vld [vmem:[%s4] sm:$0x1]
    %v179 = vperm.slane %v177, 0
    %v197 = vunpack.c.l.b16 %v161
    %v198 = vunpack.c.l.b16 %v162
    %v199 = vunpack.c.l.b16 %v163
    %v200 = vunpack.c.l.b16 %v164
    %v201 = vunpack.c.l.b16 %v165
    %v202 = vunpack.c.l.b16 %v166
    %v203 = vunpack.c.l.b16 %v167
    %v204 = vunpack.c.l.b16 %v168
    %v205 = vunpack.c.l.b16 %v169
    %v206 = vunpack.c.l.b16 %v170
    %v207 = vunpack.c.l.b16 %v171
    %v208 = vunpack.c.l.b16 %v172
    %v209 = vunpack.c.l.b16 %v173
    %v210 = vunpack.c.l.b16 %v174
    %v211 = vunpack.c.l.b16 %v175
    %v212 = vunpack.c.l.b16 %v176
    %v213 = vpack.c.b16 %v198, %v197
    %v214 = vpack.c.b16 %v200, %v199
    %v215 = vpack.c.b16 %v202, %v201
    %v216 = vpack.c.b16 %v204, %v203
    %v217 = vpack.c.b16 %v206, %v205
    %v218 = vpack.c.b16 %v208, %v207
    %v219 = vpack.c.b16 %v210, %v209
    %v220 = vpack.c.b16 %v212, %v211
    %229 = vmatpush.bf16.msra.mxu0 %v220
    %230 = vmatpush.bf16.msra.mxu0 %v219
    %231 = vmatpush.bf16.msra.mxu0 %v218
    %232 = vmatpush.bf16.msra.mxu0 %v217
    %233 = vmatpush.bf16.msra.mxu0 %v216
    %234 = vmatpush.bf16.msra.mxu0 %v215
    %235 = vmatpush.bf16.msra.mxu0 %v214
    %236 = vmatpush.bf16.msra.mxu0 %v213
    %237 = vmatmul.bf16.gmra.mxu0 %v160
    %v238 = vpop.f32.mrf.mxu0
    %v239 = vadd.f32 %v179, %v238
    %v240 = vpop.f32.mrf.mxu0
    %v241 = vadd.f32 %v179, %v240
    %242 = vdwg.mxu0
    %243 = vst [vmem:[#allocation8] sm:$0xff] %v239
    %244 = vst [vmem:[#allocation8 + $0x8] sm:$0xff] %v241
    // Predicated region
    $region34: #{tpu_custom_call.1} parent=1 // pred_check
      _
    $region35: #{tpu_custom_call.1} parent=1 // pred_check_branch
      %246 = sbr.rel (0) target = $region37
    $region36: #{tpu_custom_call.1} parent=1 // pred_region
      %248 = vsyncadd [#allocation4], 0
      %s249 = sshll.u32 [#allocation8], 4
      %s250 = int_to_ptr.vmem [resolvable:$true] %s249
      %s251 = sshll.u32 %s5, 4
      %s252 = int_to_ptr.hbm [resolvable:$true] %s251
      %257 = dma.vmem_to_hbm [thread:$0]  %s250, 256, %s252, [#allocation4], 128, 128, 8
    $region37: #{tpu_custom_call.1} parent=1 // pred_fallthru
      _
    // Predicated region
    $region38: #{tpu_custom_call.1} parent=1 // pred_check
      _
    $region39: #{tpu_custom_call.1} parent=1 // pred_check_branch
      %259 = sbr.rel (0) target = $region41
    $region40: #{tpu_custom_call.1} parent=1 // pred_region
      %261 = dma.done [#allocation4], 256
    $region41: #{tpu_custom_call.1} parent=1 // pred_fallthru
      _
    %262 = vsyncpa [#allocation3], 1
    %263 = vsyncpa [#allocation6], 1
    %264 = vsyncpa [#allocation4], 1

</llo_original>
